<compile_context>
chip_gen: v7x
topology: tpu7x:2x2x1
jax: 0.10.0
libtpu: 0.0.40
codegen_flags: <defaults>
</compile_context>

<pallas_src>
import functools
import math

import jax
import jax.numpy as jnp
from jax.experimental import pallas as pl
from jax.experimental.pallas import tpu as pltpu


def mha_kernel(q_ref, k_ref, v_ref, mask_ref,
               wq_ref, wk_ref, wv_ref, wo_ref,
               o_ref, acc_ref, bias_ref, *, d_k, compute_dtype):
    head = pl.program_id(1)
    n_heads = pl.num_programs(1)
    cd = compute_dtype

    # Per-batch init: zero the output-projection accumulator and build the
    # additive mask bias ONCE (hoisted out of the head reduction).
    @pl.when(head == 0)
    def _():
        acc_ref[...] = jnp.zeros_like(acc_ref)
        m = mask_ref[0, 0].astype(jnp.int32)                       # (S, S)
        bias_ref[...] = jnp.where(m == 0, jnp.float32(-1e9), jnp.float32(0.0))

    x_q = q_ref[0].astype(cd)                                      # (S, D)
    x_k = k_ref[0].astype(cd)
    x_v = v_ref[0].astype(cd)

    # Per-head projections.  Weights arrive in PyTorch (out, in) layout; the
    # BlockSpec hands us this head's (d_k, D) slice and dot_general contracts
    # over the 'in' axis, folding the transpose into the matmul.
    dn_t = (((1,), (1,)), ((), ()))          # contract lhs dim 1 with rhs dim 1
    Qh = jax.lax.dot_general(x_q, wq_ref[...].astype(cd), dn_t,
                             preferred_element_type=jnp.float32)   # (S, d_k)
    Kh = jax.lax.dot_general(x_k, wk_ref[...].astype(cd), dn_t,
                             preferred_element_type=jnp.float32)
    Vh = jax.lax.dot_general(x_v, wv_ref[...].astype(cd), dn_t,
                             preferred_element_type=jnp.float32)

    # Fold the 1/sqrt(d_k) softmax scale into Q once (S*d_k muls, not h*S*S).
    Qh = Qh * jnp.float32(1.0 / math.sqrt(d_k))

    # Scores: Q @ K^T with the transpose folded into the dot_general.
    s = jax.lax.dot_general(Qh.astype(cd), Kh.astype(cd), dn_t,
                            preferred_element_type=jnp.float32)    # (S, S)
    s = s + bias_ref[...]

    # Numerically stable softmax in f32; the divide goes to the EUP.
    s = s - jnp.max(s, axis=-1, keepdims=True)
    p = jnp.exp(s)
    p = p * pl.reciprocal(jnp.sum(p, axis=-1, keepdims=True), approx=True)

    ctx = jnp.dot(p.astype(cd), Vh.astype(cd),
                  preferred_element_type=jnp.float32)              # (S, d_k)

    # This head's (d_k, D) slice of W_o^T; accumulate the output projection.
    acc_ref[...] += jnp.dot(ctx.astype(cd), wo_ref[...].astype(cd),
                            preferred_element_type=jnp.float32)    # (S, D)

    @pl.when(head == n_heads - 1)
    def _():
        o_ref[0] = acc_ref[...].astype(o_ref.dtype)


def multi_head_attention(q, k, v, mask, wq, wk, wv, wo, h,
                         compute_dtype=jnp.bfloat16):
    """q,k,v: (B,S,D) f32; mask: (B,1,S,S) 0/nonzero; w*: PyTorch (out,in)."""
    B, S, D = q.shape
    out_dtype = q.dtype
    assert D % h == 0, "d_model is not divisible by h"
    d_k = D // h
    # Per-head weight blocks are (d_k, D) f32: second-minor must be a multiple of 8.
    assert d_k % 8 == 0, "d_k must be a multiple of 8 for this TPU tiling"

    # Only W_o needs a one-time transpose so its per-head block is (d_k, D)
    # with a full-width lane dim; W_q/W_k/W_v stay in (out, in) layout.
    wo_t = wo.T

    # Ship the mask as int8 (bias is rebuilt in-kernel once per batch).
    mask_i8 = (mask != 0).astype(jnp.int8)

    # Ship activations at matmul-input precision: halves q/k/v HBM->VMEM DMA on
    # the bf16 fast path (the in-kernel .astype becomes a no-op).  Their blocks
    # cover the full (S, D) extent, so any dtype tiling is accepted.  Weights
    # stay f32 so their sublane-8 per-head blocks keep the f32 (8,128) tiling.
    if compute_dtype != q.dtype:
        q = q.astype(compute_dtype)
        k = k.astype(compute_dtype)
        v = v.astype(compute_dtype)

    kernel = functools.partial(mha_kernel, d_k=d_k, compute_dtype=compute_dtype)

    return pl.pallas_call(
        kernel,
        out_shape=jax.ShapeDtypeStruct((B, S, D), out_dtype),
        grid=(B, h),
        in_specs=[
            pl.BlockSpec((1, S, D), lambda b, i: (b, 0, 0)),        # q
            pl.BlockSpec((1, S, D), lambda b, i: (b, 0, 0)),        # k
            pl.BlockSpec((1, S, D), lambda b, i: (b, 0, 0)),        # v
            pl.BlockSpec((1, 1, S, S), lambda b, i: (b, 0, 0, 0)),  # mask (int8)
            pl.BlockSpec((d_k, D), lambda b, i: (i, 0)),            # W_q rows of head i
            pl.BlockSpec((d_k, D), lambda b, i: (i, 0)),            # W_k rows of head i
            pl.BlockSpec((d_k, D), lambda b, i: (i, 0)),            # W_v rows of head i
            pl.BlockSpec((d_k, D), lambda b, i: (i, 0)),            # W_o^T rows of head i
        ],
        out_specs=pl.BlockSpec((1, S, D), lambda b, i: (b, 0, 0)),
        scratch_shapes=[
            pltpu.VMEM((S, D), jnp.float32),   # output-projection accumulator
            pltpu.VMEM((S, S), jnp.float32),   # additive mask bias (per batch)
        ],
        compiler_params=pltpu.CompilerParams(
            dimension_semantics=("parallel", "arbitrary")),
    )(q, k, v, mask_i8, wq, wk, wv, wo_t)


def reference_mha(q, k, v, mask, wq, wk, wv, wo, h):
    """Plain-JAX f32 replica of the PyTorch forward for verification."""
    B, S, D = q.shape
    d_k = D // h
    Q = q @ wq.T
    K = k @ wk.T
    V = v @ wv.T
    Qh = Q.reshape(B, S, h, d_k).transpose(0, 2, 1, 3)
    Kh = K.reshape(B, S, h, d_k).transpose(0, 2, 1, 3)
    Vh = V.reshape(B, S, h, d_k).transpose(0, 2, 1, 3)
    s = jnp.einsum('bhqd,bhkd->bhqk', Qh, Kh) / math.sqrt(d_k)
    s = jnp.where(mask == 0, -1e9, s)
    p = jax.nn.softmax(s, axis=-1)
    ctx = jnp.einsum('bhqk,bhkd->bhqd', p, Vh)
    ctx = ctx.transpose(0, 2, 1, 3).reshape(B, S, D)
    return ctx @ wo.T


if __name__ == "__main__":
    B, S, D, H = 2, 8, 32, 4   # batch, seq_len, d_model, heads (d_k = 8)

    key = jax.random.PRNGKey(0)
    kq, kk, kv, kwq, kwk, kwv, kwo = jax.random.split(key, 7)

    q = jax.random.normal(kq, (B, S, D), dtype=jnp.float32)
    k = jax.random.normal(kk, (B, S, D), dtype=jnp.float32)
    v = jax.random.normal(kv, (B, S, D), dtype=jnp.float32)

    # nn.Linear-style uniform init, PyTorch (out, in) layout, no bias.
    bound = 1.0 / math.sqrt(D)
    wq = jax.random.uniform(kwq, (D, D), jnp.float32, -bound, bound)
    wk = jax.random.uniform(kwk, (D, D), jnp.float32, -bound, bound)
    wv = jax.random.uniform(kwv, (D, D), jnp.float32, -bound, bound)
    wo = jax.random.uniform(kwo, (D, D), jnp.float32, -bound, bound)

    # Causal mask broadcast over heads, like the PyTorch (batch, 1, seq, seq) mask.
    causal = jnp.tril(jnp.ones((S, S), dtype=jnp.int32))
    mask = jnp.broadcast_to(causal[None, None, :, :], (B, 1, S, S))

    ref = reference_mha(q, k, v, mask, wq, wk, wv, wo, H)

    # 1) Exact (f32) compute path: strict check against the PyTorch-faithful reference.
    out_f32 = multi_head_attention(q, k, v, mask, wq, wk, wv, wo, H,
                                   compute_dtype=jnp.float32)
    out_f32 = jax.block_until_ready(out_f32)
    assert out_f32.shape == (B, S, D)
    assert out_f32.dtype == q.dtype
    assert jnp.allclose(out_f32, ref, atol=5e-3, rtol=5e-3), \
        f"f32 path max abs diff = {jnp.max(jnp.abs(out_f32 - ref))}"

    # 2) bf16 matmul-input fast path (v5e/v6e/v7x MXU): f32 accumulation + f32 softmax.
    out_bf16 = multi_head_attention(q, k, v, mask, wq, wk, wv, wo, H,
                                    compute_dtype=jnp.bfloat16)
    out_bf16 = jax.block_until_ready(out_bf16)
    assert out_bf16.shape == (B, S, D)
    assert out_bf16.dtype == q.dtype
    assert jnp.allclose(out_bf16, ref, atol=8e-2, rtol=8e-2), \
        f"bf16 path max abs diff = {jnp.max(jnp.abs(out_bf16 - ref))}"

    print("KERNEL_OK")
</pallas_src>

<mosaic_0001>
module attributes {stable_mosaic.version = 11 : i64} {
  func.func @mha_kernel(%arg0: i32, %arg1: i32, %arg2: memref<1x8x32xf32, #tpu.memory_space<vmem>>, %arg3: memref<1x8x32xf32, #tpu.memory_space<vmem>>, %arg4: memref<1x8x32xf32, #tpu.memory_space<vmem>>, %arg5: memref<1x1x8x8xi8, #tpu.memory_space<vmem>>, %arg6: memref<8x32xf32, #tpu.memory_space<vmem>>, %arg7: memref<8x32xf32, #tpu.memory_space<vmem>>, %arg8: memref<8x32xf32, #tpu.memory_space<vmem>>, %arg9: memref<8x32xf32, #tpu.memory_space<vmem>>, %arg10: memref<1x8x32xf32, #tpu.memory_space<vmem>>, %arg11: memref<8x32xf32, #tpu.memory_space<vmem>>, %arg12: memref<8x8xf32, #tpu.memory_space<vmem>>) attributes {dimension_semantics = [#tpu.dimension_semantics<parallel>, #tpu.dimension_semantics<arbitrary>], iteration_bounds = array<i64: 2, 4>, scalar_prefetch = 0 : i64, scratch_operands = 2 : i64, tpu.core_type = #tpu.core_type<tc>, window_params = [{transform_indices = @transform_0, window_bounds = array<i64: 1, 8, 32>}, {transform_indices = @transform_1, window_bounds = array<i64: 1, 8, 32>}, {transform_indices = @transform_2, window_bounds = array<i64: 1, 8, 32>}, {transform_indices = @transform_3, window_bounds = array<i64: 1, 1, 8, 8>}, {transform_indices = @transform_4, window_bounds = array<i64: 8, 32>}, {transform_indices = @transform_5, window_bounds = array<i64: 8, 32>}, {transform_indices = @transform_6, window_bounds = array<i64: 8, 32>}, {transform_indices = @transform_7, window_bounds = array<i64: 8, 32>}, {transform_indices = @transform_8, window_bounds = array<i64: 1, 8, 32>}]} {
    %c0_i32 = arith.constant 0 : i32
    %0 = arith.cmpi eq, %arg1, %c0_i32 : i32
    %1 = arith.extui %0 : i1 to i32
    %c0_i32_0 = arith.constant 0 : i32
    %2 = arith.cmpi ne, %1, %c0_i32_0 : i32
    scf.if %2 {
      %cst_32 = arith.constant 0.000000e+00 : f32
      %39 = vector.broadcast %cst_32 : f32 to vector<8x32xf32>
      %c0_33 = arith.constant 0 : index
      %c0_34 = arith.constant 0 : index
      %40 = vector.load %arg11[%c0_33, %c0_34] : memref<8x32xf32, #tpu.memory_space<vmem>>, vector<8x32xf32>
      tpu.vector_store %arg11[%c0_33, %c0_34], %39 {strides = array<i32>} : memref<8x32xf32, #tpu.memory_space<vmem>>, vector<8x32xf32>,
      %c0_35 = arith.constant 0 : index
      %c0_36 = arith.constant 0 : index
      %c0_37 = arith.constant 0 : index
      %c0_38 = arith.constant 0 : index
      %41 = vector.load %arg5[%c0_35, %c0_36, %c0_37, %c0_38] : memref<1x1x8x8xi8, #tpu.memory_space<vmem>>, vector<1x1x8x8xi8>
      %42 = vector.shape_cast %41 : vector<1x1x8x8xi8> to vector<8x8xi8>
      %43 = arith.extsi %42 : vector<8x8xi8> to vector<8x8xi32>
      %c0_i32_39 = arith.constant 0 : i32
      %44 = vector.broadcast %c0_i32_39 : i32 to vector<8x8xi32>
      %45 = arith.cmpi eq, %43, %44 : vector<8x8xi32>
      %cst_40 = arith.constant -1.000000e+09 : f32
      %cst_41 = arith.constant 0.000000e+00 : f32
      %46 = vector.broadcast %cst_40 : f32 to vector<8x8xf32>
      %47 = vector.broadcast %cst_41 : f32 to vector<8x8xf32>
      %48 = arith.select %45, %46, %47 : vector<8x8xi1>, vector<8x8xf32>
      %c0_42 = arith.constant 0 : index
      %c0_43 = arith.constant 0 : index
      %49 = vector.load %arg12[%c0_42, %c0_43] : memref<8x8xf32, #tpu.memory_space<vmem>>, vector<8x8xf32>
      tpu.vector_store %arg12[%c0_42, %c0_43], %48 {strides = array<i32>} : memref<8x8xf32, #tpu.memory_space<vmem>>, vector<8x8xf32>,
    } else {
    }
    %c0 = arith.constant 0 : index
    %c0_1 = arith.constant 0 : index
    %c0_2 = arith.constant 0 : index
    %3 = vector.load %arg2[%c0, %c0_1, %c0_2] : memref<1x8x32xf32, #tpu.memory_space<vmem>>, vector<1x8x32xf32>
    %4 = vector.shape_cast %3 : vector<1x8x32xf32> to vector<8x32xf32>
    %c0_3 = arith.constant 0 : index
    %c0_4 = arith.constant 0 : index
    %c0_5 = arith.constant 0 : index
    %5 = vector.load %arg3[%c0_3, %c0_4, %c0_5] : memref<1x8x32xf32, #tpu.memory_space<vmem>>, vector<1x8x32xf32>
    %6 = vector.shape_cast %5 : vector<1x8x32xf32> to vector<8x32xf32>
    %c0_6 = arith.constant 0 : index
    %c0_7 = arith.constant 0 : index
    %c0_8 = arith.constant 0 : index
    %7 = vector.load %arg4[%c0_6, %c0_7, %c0_8] : memref<1x8x32xf32, #tpu.memory_space<vmem>>, vector<1x8x32xf32>
    %8 = vector.shape_cast %7 : vector<1x8x32xf32> to vector<8x32xf32>
    %c0_9 = arith.constant 0 : index
    %c0_10 = arith.constant 0 : index
    %9 = vector.load %arg6[%c0_9, %c0_10] : memref<8x32xf32, #tpu.memory_space<vmem>>, vector<8x32xf32>
    %cst = arith.constant dense<0.000000e+00> : vector<8x8xf32>
    %10 = tpu.matmul %4, %9, %cst {dimension_numbers = #tpu.dot_dimension_numbers<[1], [1], [0], [0], [0, 0, 1, 0], [], []>} : vector<8x32xf32>, vector<8x32xf32>, vector<8x8xf32> -> vector<8x8xf32>
    %c0_11 = arith.constant 0 : index
    %c0_12 = arith.constant 0 : index
    %11 = vector.load %arg7[%c0_11, %c0_12] : memref<8x32xf32, #tpu.memory_space<vmem>>, vector<8x32xf32>
    %cst_13 = arith.constant dense<0.000000e+00> : vector<8x8xf32>
    %12 = tpu.matmul %6, %11, %cst_13 {dimension_numbers = #tpu.dot_dimension_numbers<[1], [1], [0], [0], [0, 0, 1, 0], [], []>} : vector<8x32xf32>, vector<8x32xf32>, vector<8x8xf32> -> vector<8x8xf32>
    %c0_14 = arith.constant 0 : index
    %c0_15 = arith.constant 0 : index
    %13 = vector.load %arg8[%c0_14, %c0_15] : memref<8x32xf32, #tpu.memory_space<vmem>>, vector<8x32xf32>
    %cst_16 = arith.constant dense<0.000000e+00> : vector<8x8xf32>
    %14 = tpu.matmul %8, %13, %cst_16 {dimension_numbers = #tpu.dot_dimension_numbers<[1], [1], [0], [0], [0, 0, 1, 0], [], []>} : vector<8x32xf32>, vector<8x32xf32>, vector<8x8xf32> -> vector<8x8xf32>
    %cst_17 = arith.constant 0.353553385 : f32
    %15 = vector.broadcast %cst_17 : f32 to vector<8x8xf32>
    %16 = arith.mulf %10, %15 : vector<8x8xf32>
    %cst_18 = arith.constant dense<0.000000e+00> : vector<8x8xf32>
    %17 = tpu.matmul %16, %12, %cst_18 {dimension_numbers = #tpu.dot_dimension_numbers<[1], [1], [0], [0], [0, 0, 1, 0], [], []>} : vector<8x8xf32>, vector<8x8xf32>, vector<8x8xf32> -> vector<8x8xf32>
    %c0_19 = arith.constant 0 : index
    %c0_20 = arith.constant 0 : index
    %18 = vector.load %arg12[%c0_19, %c0_20] : memref<8x8xf32, #tpu.memory_space<vmem>>, vector<8x8xf32>
    %19 = arith.addf %17, %18 : vector<8x8xf32>
    %cst_21 = arith.constant dense<0xFF800000> : vector<8xf32>
    %20 = vector.multi_reduction <maximumf>, %19, %cst_21 [1] : vector<8x8xf32> to vector<8xf32>
    %21 = vector.shape_cast %20 : vector<8xf32> to vector<8x1xf32>
    %22 = vector.broadcast %21 : vector<8x1xf32> to vector<8x8xf32>
    %23 = arith.subf %19, %22 : vector<8x8xf32>
    %24 = math.exp %23 : vector<8x8xf32>
    %cst_22 = arith.constant dense<0.000000e+00> : vector<8xf32>
    %25 = vector.multi_reduction <add>, %24, %cst_22 [1] : vector<8x8xf32> to vector<8xf32>
    %26 = vector.shape_cast %25 : vector<8xf32> to vector<8x1xf32>
    %27 = tpu.reciprocal %26 {approx = true} : vector<8x1xf32> -> vector<8x1xf32>
    %28 = vector.broadcast %27 : vector<8x1xf32> to vector<8x8xf32>
    %29 = arith.mulf %24, %28 : vector<8x8xf32>
    %cst_23 = arith.constant dense<0.000000e+00> : vector<8x8xf32>
    %30 = tpu.matmul %29, %14, %cst_23 {dimension_numbers = #tpu.dot_dimension_numbers<[1], [0], [0], [1], [0, 0, 1, 1], [], []>} : vector<8x8xf32>, vector<8x8xf32>, vector<8x8xf32> -> vector<8x8xf32>
    %c0_24 = arith.constant 0 : index
    %c0_25 = arith.constant 0 : index
    %31 = vector.load %arg11[%c0_24, %c0_25] : memref<8x32xf32, #tpu.memory_space<vmem>>, vector<8x32xf32>
    %c0_26 = arith.constant 0 : index
    %c0_27 = arith.constant 0 : index
    %32 = vector.load %arg9[%c0_26, %c0_27] : memref<8x32xf32, #tpu.memory_space<vmem>>, vector<8x32xf32>
    %cst_28 = arith.constant dense<0.000000e+00> : vector<8x32xf32>
    %33 = tpu.matmul %30, %32, %cst_28 {dimension_numbers = #tpu.dot_dimension_numbers<[1], [0], [0], [1], [0, 0, 1, 1], [], []>} : vector<8x8xf32>, vector<8x32xf32>, vector<8x32xf32> -> vector<8x32xf32>
    %34 = arith.addf %31, %33 : vector<8x32xf32>
    %c0_29 = arith.constant 0 : index
    %c0_30 = arith.constant 0 : index
    %35 = vector.load %arg11[%c0_29, %c0_30] : memref<8x32xf32, #tpu.memory_space<vmem>>, vector<8x32xf32>
    tpu.vector_store %arg11[%c0_29, %c0_30], %34 {strides = array<i32>} : memref<8x32xf32, #tpu.memory_space<vmem>>, vector<8x32xf32>,
    %c3_i32 = arith.constant 3 : i32
    %36 = arith.cmpi eq, %arg1, %c3_i32 : i32
    %37 = arith.extui %36 : i1 to i32
    %c0_i32_31 = arith.constant 0 : i32
    %38 = arith.cmpi ne, %37, %c0_i32_31 : i32
    scf.if %38 {
      %c0_32 = arith.constant 0 : index
      %c0_33 = arith.constant 0 : index
      %39 = vector.load %arg11[%c0_32, %c0_33] : memref<8x32xf32, #tpu.memory_space<vmem>>, vector<8x32xf32>
      %c0_34 = arith.constant 0 : index
      %c0_35 = arith.constant 0 : index
      %c0_36 = arith.constant 0 : index
      %40 = vector.load %arg10[%c0_34, %c0_35, %c0_36] : memref<1x8x32xf32, #tpu.memory_space<vmem>>, vector<1x8x32xf32>
      %41 = vector.shape_cast %40 : vector<1x8x32xf32> to vector<8x32xf32>
      %42 = vector.shape_cast %39 : vector<8x32xf32> to vector<1x8x32xf32>
      tpu.vector_store %arg10[%c0_34, %c0_35, %c0_36], %42 {strides = array<i32>} : memref<1x8x32xf32, #tpu.memory_space<vmem>>, vector<1x8x32xf32>,
    } else {
    }
    return
  }
  func.func @transform_0(%arg0: i32, %arg1: i32) -> (i32, i32, i32) {
    %c0_i32 = arith.constant 0 : i32
    %c0_i32_0 = arith.constant 0 : i32
    %c0_i32_1 = arith.constant 0 : i32
    return %arg0, %c0_i32, %c0_i32_0 : i32, i32, i32
  }
  func.func @transform_1(%arg0: i32, %arg1: i32) -> (i32, i32, i32) {
    %c0_i32 = arith.constant 0 : i32
    %c0_i32_0 = arith.constant 0 : i32
    %c0_i32_1 = arith.constant 0 : i32
    return %arg0, %c0_i32, %c0_i32_0 : i32, i32, i32
  }
  func.func @transform_2(%arg0: i32, %arg1: i32) -> (i32, i32, i32) {
    %c0_i32 = arith.constant 0 : i32
    %c0_i32_0 = arith.constant 0 : i32
    %c0_i32_1 = arith.constant 0 : i32
    return %arg0, %c0_i32, %c0_i32_0 : i32, i32, i32
  }
  func.func @transform_3(%arg0: i32, %arg1: i32) -> (i32, i32, i32, i32) {
    %c0_i32 = arith.constant 0 : i32
    %c0_i32_0 = arith.constant 0 : i32
    %c0_i32_1 = arith.constant 0 : i32
    %c0_i32_2 = arith.constant 0 : i32
    return %arg0, %c0_i32, %c0_i32_0, %c0_i32_1 : i32, i32, i32, i32
  }
  func.func @transform_4(%arg0: i32, %arg1: i32) -> (i32, i32) {
    %c0_i32 = arith.constant 0 : i32
    %c0_i32_0 = arith.constant 0 : i32
    return %arg1, %c0_i32 : i32, i32
  }
  func.func @transform_5(%arg0: i32, %arg1: i32) -> (i32, i32) {
    %c0_i32 = arith.constant 0 : i32
    %c0_i32_0 = arith.constant 0 : i32
    return %arg1, %c0_i32 : i32, i32
  }
  func.func @transform_6(%arg0: i32, %arg1: i32) -> (i32, i32) {
    %c0_i32 = arith.constant 0 : i32
    %c0_i32_0 = arith.constant 0 : i32
    return %arg1, %c0_i32 : i32, i32
  }
  func.func @transform_7(%arg0: i32, %arg1: i32) -> (i32, i32) {
    %c0_i32 = arith.constant 0 : i32
    %c0_i32_0 = arith.constant 0 : i32
    return %arg1, %c0_i32 : i32, i32
  }
  func.func @transform_8(%arg0: i32, %arg1: i32) -> (i32, i32, i32) {
    %c0_i32 = arith.constant 0 : i32
    %c0_i32_0 = arith.constant 0 : i32
    %c0_i32_1 = arith.constant 0 : i32
    return %arg0, %c0_i32, %c0_i32_0 : i32, i32, i32
  }
}

</mosaic_0001>

<llo_original>
// kernel: tpu_custom_call.1
$region0: #{tpu_custom_call.1}
  #allocation0 [shape = 'u32[]', space=smem, size = 0x4, offset = 0x4, fixed_abs, tag = 'smem constant byte address 0x4 - core index']
  #allocation1 [shape = 'u32[144,128]{1,0:T(1,128)}', space=vmem, size = 0x12000, scoped, tag = 'internal scratch']
  #allocation2 [shape = 'f32[8,32]{1,0:T(8,128)}', space=vmem, size = 0x1000, scoped, tag = 'scratch operand']
  #allocation3 [shape = 'f32[8,8]{1,0:T(8,128)}', space=vmem, size = 0x1000, scoped, tag = 'scratch operand']
  %s0 = inlined_call_operand.hbm [shape: f32[2,8,32], index: 0, kind: input, shape index: {}]
  %s1 = inlined_call_operand.hbm [shape: f32[2,8,32], index: 1, kind: input, shape index: {}]
  %s2 = inlined_call_operand.hbm [shape: f32[2,8,32], index: 2, kind: input, shape index: {}]
  %s3 = inlined_call_operand.vmem [shape: s8[2,1,8,8], index: 3, kind: input, shape index: {}]
  %s4 = inlined_call_operand.hbm [shape: f32[32,32], index: 4, kind: input, shape index: {}]
  %s5 = inlined_call_operand.hbm [shape: f32[32,32], index: 5, kind: input, shape index: {}]
  %s6 = inlined_call_operand.hbm [shape: f32[32,32], index: 6, kind: input, shape index: {}]
  %s7 = inlined_call_operand.hbm [shape: f32[32,32], index: 7, kind: input, shape index: {}]
  %s8 = inlined_call_operand.hbm [shape: f32[2,8,32], index: 8, kind: output, shape index: {}]
  %s9 = sld [smem:[#allocation0]]
  $region101: #{tpu_custom_call.1} parent=0
    _
  %s11 = ssub.s32 1, %s9
  %s12 = scalar_select 0, %s11, %s9
  $region1: #{tpu_custom_call.1} parent=0
    #allocation4 [shape = 'u8[8192]{0}', space=vmem, size = 0x2000, scoped, tag = 'input window, operand 0']
    #allocation5 [shape = 's32[2]{0}', space=sflag, size = 0x8, scoped, tag = 'scoped memory for tpu_custom_call.1']
    #allocation6 [shape = 's32[2]{0}', space=sflag, size = 0x8, scoped, tag = 'scoped memory for tpu_custom_call.1']
    #allocation7 [shape = 'u8[8192]{0}', space=vmem, size = 0x2000, scoped, tag = 'input window, operand 1']
    #allocation8 [shape = 's32[2]{0}', space=sflag, size = 0x8, scoped, tag = 'scoped memory for tpu_custom_call.1']
    #allocation9 [shape = 'u8[8192]{0}', space=vmem, size = 0x2000, scoped, tag = 'input window, operand 2']
    #allocation10 [shape = 'u8[8192]{0}', space=vmem, size = 0x2000, scoped, tag = 'input window, operand 4']
    #allocation11 [shape = 's32[2]{0}', space=sflag, size = 0x8, scoped, tag = 'scoped memory for tpu_custom_call.1']
    #allocation12 [shape = 'u8[8192]{0}', space=vmem, size = 0x2000, scoped, tag = 'input window, operand 5']
    #allocation13 [shape = 'u8[8192]{0}', space=vmem, size = 0x2000, scoped, tag = 'input window, operand 6']
    #allocation14 [shape = 's32[2]{0}', space=sflag, size = 0x8, scoped, tag = 'scoped memory for tpu_custom_call.1']
    #allocation15 [shape = 'u8[8192]{0}', space=vmem, size = 0x2000, scoped, tag = 'input window, operand 7']
    #allocation16 [shape = 'u8[8192]{0}', space=vmem, size = 0x2000, scoped, tag = 'output window, operand 0']
    %13 = vsyncpa [#allocation5], 0
    %s14 = scalar_lea.sflag [#allocation5], 1
    %15 = vsyncpa %s14, 0
    %16 = vsyncpa [#allocation8], 0
    %s17 = scalar_lea.sflag [#allocation8], 1
    %18 = vsyncpa %s17, 0
    %19 = vsyncpa [#allocation11], 0
    %s20 = scalar_lea.sflag [#allocation11], 1
    %21 = vsyncpa %s20, 0
    %22 = vsyncpa [#allocation14], 0
    %s23 = scalar_lea.sflag [#allocation14], 1
    %24 = vsyncpa %s23, 0
    %25 = vsyncpa [#allocation6], 0
    %s26 = scalar_lea.sflag [#allocation6], 1
    %27 = vsyncpa %s26, 0
    loop: start=0, step=1, limit=10
    $region2: #{tpu_custom_call.1} parent=1 // loop_pre_header
      _
    $region3: #{tpu_custom_call.1} parent=1 // loop_header
      %s29 = sphi 0, %s33
      %p30 = scmp.ge.s32.totalorder %s29, 10
      %s36 = sphi 0, %s48
      %s37 = sphi 0, %s44
      %s38 = sphi 0, %s36
      %s39 = sphi 0, %s37
      %s40 = sphi 0, %s38
      %s41 = sphi 0, %s39
      %s51 = sphi 0, %s53
      %s54 = sphi 0, %s51
      %s55 = sphi 0, %s54
      %s71 = sphi 0, %s55
      %s77 = sphi 0, %s79
      %s80 = sphi 0, %s77
      %s81 = sphi 0, %s80
      %s97 = sphi 0, %s81
      %s103 = sphi 0, %s105
      %s106 = sphi 0, %s103
      %s107 = sphi 0, %s106
      %s123 = sphi 0, %s107
      %s129 = sphi 0, %s131
      %s132 = sphi 0, %s129
      %s133 = sphi 0, %s132
      %s149 = sphi 0, %s133
      %s155 = sphi 0, %s157
      %s158 = sphi 0, %s155
      %s159 = sphi 0, %s158
      %s175 = sphi 0, %s159
      %s181 = sphi 0, %s183
      %s184 = sphi 0, %s181
      %s185 = sphi 0, %s184
      %s201 = sphi 0, %s185
      %s207 = sphi 0, %s209
      %s210 = sphi 0, %s207
      %s211 = sphi 0, %s210
      %s227 = sphi 0, %s211
      %s233 = sphi 0, %s235
      %s236 = sphi 0, %s233
      %s237 = sphi 0, %s236
      %s253 = sphi 0, %s237
      %s259 = sphi 0, %s261
      %s262 = sphi 0, %s259
      %s263 = sphi 0, %s262
      %s279 = sphi 0, %s263
    $region4: #{tpu_custom_call.1} parent=1 // loop_header_branch
      %32 = sbr.rel (%p30) target = $region8
    $region5: #{tpu_custom_call.1} parent=1 // loop_body
      %s34 = ssub.s32 %s29, 1
      %s35 = ssub.s32 %s29, 2
      %s42 = sadd.s32 1, %s37
      %p43 = scmp.ge.s32.totalorder %s42, 4
      %s44 = scalar_select %p43, 0, %s42
      %s45 = sadd.s32 1, %s36
      %s46 = scalar_select %p43, %s45, %s36
      %p47 = scmp.ge.s32.totalorder %s46, 2
      %s48 = scalar_select %p47, 0, %s46
      %s49 = ssub.s32 %s36, %s48
      %p50 = scmp.eq.s32.totalorder %s49, 0
      %s52 = sadd.s32 %s51, 1
      %s53 = scalar_select %p50, %s51, %s52
      %p56 = pneg %p50
      %p57 = scmp.eq.s32.totalorder %s29, 7
      %p58 = por %p56, %p57
      %p59 = scmp.ne.s32.totalorder %s51, %s54
      %p60 = scmp.eq.s32.totalorder %s29, 0
      %p61 = por %p59, %p60
      %p62 = scmp.ne.s32.totalorder %s51, %s54
      %p63 = scmp.eq.s32.totalorder %s34, 7
      %p64 = por %p62, %p63
      %p65 = scmp.ne.s32.totalorder %s54, %s55
      %p66 = scmp.eq.s32.totalorder %s34, 0
      %p67 = por %p65, %p66
      %p68 = scmp.ne.s32.totalorder %s54, %s55
      %p69 = scmp.eq.s32.totalorder %s35, 7
      %p70 = por %p68, %p69
      %p72 = scmp.ne.s32.totalorder %s55, %s71
      %p73 = scmp.eq.s32.totalorder %s35, 0
      %p74 = por %p72, %p73
      %s75 = ssub.s32 %s36, %s48
      %p76 = scmp.eq.s32.totalorder %s75, 0
      %s78 = sadd.s32 %s77, 1
      %s79 = scalar_select %p76, %s77, %s78
      %p82 = pneg %p76
      %p83 = scmp.eq.s32.totalorder %s29, 7
      %p84 = por %p82, %p83
      %p85 = scmp.ne.s32.totalorder %s77, %s80
      %p86 = scmp.eq.s32.totalorder %s29, 0
      %p87 = por %p85, %p86
      %p88 = scmp.ne.s32.totalorder %s77, %s80
      %p89 = scmp.eq.s32.totalorder %s34, 7
      %p90 = por %p88, %p89
      %p91 = scmp.ne.s32.totalorder %s80, %s81
      %p92 = scmp.eq.s32.totalorder %s34, 0
      %p93 = por %p91, %p92
      %p94 = scmp.ne.s32.totalorder %s80, %s81
      %p95 = scmp.eq.s32.totalorder %s35, 7
      %p96 = por %p94, %p95
      %p98 = scmp.ne.s32.totalorder %s81, %s97
      %p99 = scmp.eq.s32.totalorder %s35, 0
      %p100 = por %p98, %p99
      %s101 = ssub.s32 %s36, %s48
      %p102 = scmp.eq.s32.totalorder %s101, 0
      %s104 = sadd.s32 %s103, 1
      %s105 = scalar_select %p102, %s103, %s104
      %p108 = pneg %p102
      %p109 = scmp.eq.s32.totalorder %s29, 7
      %p110 = por %p108, %p109
      %p111 = scmp.ne.s32.totalorder %s103, %s106
      %p112 = scmp.eq.s32.totalorder %s29, 0
      %p113 = por %p111, %p112
      %p114 = scmp.ne.s32.totalorder %s103, %s106
      %p115 = scmp.eq.s32.totalorder %s34, 7
      %p116 = por %p114, %p115
      %p117 = scmp.ne.s32.totalorder %s106, %s107
      %p118 = scmp.eq.s32.totalorder %s34, 0
      %p119 = por %p117, %p118
      %p120 = scmp.ne.s32.totalorder %s106, %s107
      %p121 = scmp.eq.s32.totalorder %s35, 7
      %p122 = por %p120, %p121
      %p124 = scmp.ne.s32.totalorder %s107, %s123
      %p125 = scmp.eq.s32.totalorder %s35, 0
      %p126 = por %p124, %p125
      %s127 = ssub.s32 %s36, %s48
      %p128 = scmp.eq.s32.totalorder %s127, 0
      %s130 = sadd.s32 %s129, 1
      %s131 = scalar_select %p128, %s129, %s130
      %p134 = pneg %p128
      %p135 = scmp.eq.s32.totalorder %s29, 7
      %p136 = por %p134, %p135
      %p137 = scmp.ne.s32.totalorder %s129, %s132
      %p138 = scmp.eq.s32.totalorder %s29, 0
      %p139 = por %p137, %p138
      %p140 = scmp.ne.s32.totalorder %s129, %s132
      %p141 = scmp.eq.s32.totalorder %s34, 7
      %p142 = por %p140, %p141
      %p143 = scmp.ne.s32.totalorder %s132, %s133
      %p144 = scmp.eq.s32.totalorder %s34, 0
      %p145 = por %p143, %p144
      %p146 = scmp.ne.s32.totalorder %s132, %s133
      %p147 = scmp.eq.s32.totalorder %s35, 7
      %p148 = por %p146, %p147
      %p150 = scmp.ne.s32.totalorder %s133, %s149
      %p151 = scmp.eq.s32.totalorder %s35, 0
      %p152 = por %p150, %p151
      %s153 = ssub.s32 %s37, %s44
      %p154 = scmp.eq.s32.totalorder %s153, 0
      %s156 = sadd.s32 %s155, 1
      %s157 = scalar_select %p154, %s155, %s156
      %p160 = pneg %p154
      %p161 = scmp.eq.s32.totalorder %s29, 7
      %p162 = por %p160, %p161
      %p163 = scmp.ne.s32.totalorder %s155, %s158
      %p164 = scmp.eq.s32.totalorder %s29, 0
      %p165 = por %p163, %p164
      %p166 = scmp.ne.s32.totalorder %s155, %s158
      %p167 = scmp.eq.s32.totalorder %s34, 7
      %p168 = por %p166, %p167
      %p169 = scmp.ne.s32.totalorder %s158, %s159
      %p170 = scmp.eq.s32.totalorder %s34, 0
      %p171 = por %p169, %p170
      %p172 = scmp.ne.s32.totalorder %s158, %s159
      %p173 = scmp.eq.s32.totalorder %s35, 7
      %p174 = por %p172, %p173
      %p176 = scmp.ne.s32.totalorder %s159, %s175
      %p177 = scmp.eq.s32.totalorder %s35, 0
      %p178 = por %p176, %p177
      %s179 = ssub.s32 %s37, %s44
      %p180 = scmp.eq.s32.totalorder %s179, 0
      %s182 = sadd.s32 %s181, 1
      %s183 = scalar_select %p180, %s181, %s182
      %p186 = pneg %p180
      %p187 = scmp.eq.s32.totalorder %s29, 7
      %p188 = por %p186, %p187
      %p189 = scmp.ne.s32.totalorder %s181, %s184
      %p190 = scmp.eq.s32.totalorder %s29, 0
      %p191 = por %p189, %p190
      %p192 = scmp.ne.s32.totalorder %s181, %s184
      %p193 = scmp.eq.s32.totalorder %s34, 7
      %p194 = por %p192, %p193
      %p195 = scmp.ne.s32.totalorder %s184, %s185
      %p196 = scmp.eq.s32.totalorder %s34, 0
      %p197 = por %p195, %p196
      %p198 = scmp.ne.s32.totalorder %s184, %s185
      %p199 = scmp.eq.s32.totalorder %s35, 7
      %p200 = por %p198, %p199
      %p202 = scmp.ne.s32.totalorder %s185, %s201
      %p203 = scmp.eq.s32.totalorder %s35, 0
      %p204 = por %p202, %p203
      %s205 = ssub.s32 %s37, %s44
      %p206 = scmp.eq.s32.totalorder %s205, 0
      %s208 = sadd.s32 %s207, 1
      %s209 = scalar_select %p206, %s207, %s208
      %p212 = pneg %p206
      %p213 = scmp.eq.s32.totalorder %s29, 7
      %p214 = por %p212, %p213
      %p215 = scmp.ne.s32.totalorder %s207, %s210
      %p216 = scmp.eq.s32.totalorder %s29, 0
      %p217 = por %p215, %p216
      %p218 = scmp.ne.s32.totalorder %s207, %s210
      %p219 = scmp.eq.s32.totalorder %s34, 7
      %p220 = por %p218, %p219
      %p221 = scmp.ne.s32.totalorder %s210, %s211
      %p222 = scmp.eq.s32.totalorder %s34, 0
      %p223 = por %p221, %p222
      %p224 = scmp.ne.s32.totalorder %s210, %s211
      %p225 = scmp.eq.s32.totalorder %s35, 7
      %p226 = por %p224, %p225
      %p228 = scmp.ne.s32.totalorder %s211, %s227
      %p229 = scmp.eq.s32.totalorder %s35, 0
      %p230 = por %p228, %p229
      %s231 = ssub.s32 %s37, %s44
      %p232 = scmp.eq.s32.totalorder %s231, 0
      %s234 = sadd.s32 %s233, 1
      %s235 = scalar_select %p232, %s233, %s234
      %p238 = pneg %p232
      %p239 = scmp.eq.s32.totalorder %s29, 7
      %p240 = por %p238, %p239
      %p241 = scmp.ne.s32.totalorder %s233, %s236
      %p242 = scmp.eq.s32.totalorder %s29, 0
      %p243 = por %p241, %p242
      %p244 = scmp.ne.s32.totalorder %s233, %s236
      %p245 = scmp.eq.s32.totalorder %s34, 7
      %p246 = por %p244, %p245
      %p247 = scmp.ne.s32.totalorder %s236, %s237
      %p248 = scmp.eq.s32.totalorder %s34, 0
      %p249 = por %p247, %p248
      %p250 = scmp.ne.s32.totalorder %s236, %s237
      %p251 = scmp.eq.s32.totalorder %s35, 7
      %p252 = por %p250, %p251
      %p254 = scmp.ne.s32.totalorder %s237, %s253
      %p255 = scmp.eq.s32.totalorder %s35, 0
      %p256 = por %p254, %p255
      %s257 = ssub.s32 %s36, %s48
      %p258 = scmp.eq.s32.totalorder %s257, 0
      %s260 = sadd.s32 %s259, 1
      %s261 = scalar_select %p258, %s259, %s260
      %p264 = pneg %p258
      %p265 = scmp.eq.s32.totalorder %s29, 7
      %p266 = por %p264, %p265
      %p267 = scmp.ne.s32.totalorder %s259, %s262
      %p268 = scmp.eq.s32.totalorder %s29, 0
      %p269 = por %p267, %p268
      %p270 = scmp.ne.s32.totalorder %s259, %s262
      %p271 = scmp.eq.s32.totalorder %s34, 7
      %p272 = por %p270, %p271
      %p273 = scmp.ne.s32.totalorder %s262, %s263
      %p274 = scmp.eq.s32.totalorder %s34, 0
      %p275 = por %p273, %p274
      %p276 = scmp.ne.s32.totalorder %s262, %s263
      %p277 = scmp.eq.s32.totalorder %s35, 7
      %p278 = por %p276, %p277
      %p280 = scmp.ne.s32.totalorder %s263, %s279
      %p281 = scmp.eq.s32.totalorder %s35, 0
      %p282 = por %p280, %p281
      %p283 = scmp.le.s32.totalorder 1, %s29
      %p284 = scmp.lt.s32.totalorder %s29, 9
      %p285 = pnand %p283, %p284
      %p286 = pneg %p285
      // Predicated region
      $region9: #{tpu_custom_call.1} parent=5 // pred_check
        _
      $region10: #{tpu_custom_call.1} parent=5 // pred_check_branch
        %288 = sbr.rel (%p285) target = $region12
      $region11: #{tpu_custom_call.1} parent=5 // pred_region
        %s289 = ssub.s32 %s29, 1
      $region12: #{tpu_custom_call.1} parent=5 // pred_fallthru
        _
      %p290 = scmp.lt.s32.totalorder %s29, 8
      // Predicated region
      $region13: #{tpu_custom_call.1} parent=5 // pred_check
        %p291 = pneg %p290
      $region14: #{tpu_custom_call.1} parent=5 // pred_check_branch
        %293 = sbr.rel (%p291) target = $region16
      $region15: #{tpu_custom_call.1} parent=5 // pred_region
        // Predicated region
        $region17: #{tpu_custom_call.1} parent=15 // pred_check
          %p294 = pneg %p61
        $region18: #{tpu_custom_call.1} parent=15 // pred_check_branch
          %296 = sbr.rel (%p294) target = $region20
        $region19: #{tpu_custom_call.1} parent=15 // pred_region
          %s297 = sand.u32 %s51, 1
          %s298 = scalar_lea.sflag [#allocation5], %s297
          %s299 = sand.u32 %s51, 1
          %s300 = smul.addr %s299, 8
          %s301 = scalar_lea.vmem [#allocation4], %s300
          %s303 = ssub.s32 128, 128
          %304 = vsyncadd %s298, %s303
          %s305 = smul.addr %s36, 128
          %s306 = scalar_lea.hbm %s0, %s305
          %s308 = sshll.u32 %s301, 4
          %s309 = int_to_ptr.vmem [resolvable:$true] %s308
          %311 = dma.hbm_to_vmem [thread:$0]  %s306, 128, %s309, %s298
        $region20: #{tpu_custom_call.1} parent=15 // pred_fallthru
          _
        // Predicated region
        $region21: #{tpu_custom_call.1} parent=15 // pred_check
          %p312 = pneg %p87
        $region22: #{tpu_custom_call.1} parent=15 // pred_check_branch
          %314 = sbr.rel (%p312) target = $region24
        $region23: #{tpu_custom_call.1} parent=15 // pred_region
          %s315 = sand.u32 %s29, 1
          %s316 = scalar_lea.sflag [#allocation8], %s315
          %s317 = sand.u32 %s77, 1
          %s318 = smul.addr %s317, 8
          %s319 = scalar_lea.vmem [#allocation7], %s318
          %s321 = ssub.s32 128, 128
          %322 = vsyncadd %s316, %s321
          %s323 = smul.addr %s36, 128
          %s324 = scalar_lea.hbm %s1, %s323
          %s326 = sshll.u32 %s319, 4
          %s327 = int_to_ptr.vmem [resolvable:$true] %s326
          %329 = dma.hbm_to_vmem [thread:$0]  %s324, 128, %s327, %s316
        $region24: #{tpu_custom_call.1} parent=15 // pred_fallthru
          _
        // Predicated region
        $region25: #{tpu_custom_call.1} parent=15 // pred_check
          %p330 = pneg %p113
        $region26: #{tpu_custom_call.1} parent=15 // pred_check_branch
          %332 = sbr.rel (%p330) target = $region28
        $region27: #{tpu_custom_call.1} parent=15 // pred_region
          %s333 = sand.u32 %s29, 1
          %s334 = scalar_lea.sflag [#allocation8], %s333
          %s335 = sand.u32 %s103, 1
          %s336 = smul.addr %s335, 8
          %s337 = scalar_lea.vmem [#allocation9], %s336
          %s339 = ssub.s32 128, 128
          %340 = vsyncadd %s334, %s339
          %s341 = smul.addr %s36, 128
          %s342 = scalar_lea.hbm %s2, %s341
          %s344 = sshll.u32 %s337, 4
          %s345 = int_to_ptr.vmem [resolvable:$true] %s344
          %347 = dma.hbm_to_vmem [thread:$0]  %s342, 128, %s345, %s334
        $region28: #{tpu_custom_call.1} parent=15 // pred_fallthru
          _
        // Predicated region
        $region29: #{tpu_custom_call.1} parent=15 // pred_check
          %p348 = pneg %p139
        $region30: #{tpu_custom_call.1} parent=15 // pred_check_branch
          %350 = sbr.rel (%p348) target = $region32
        $region31: #{tpu_custom_call.1} parent=15 // pred_region
          %p351 = scmp.lt.s32.totalorder %s36, 1
          %s352 = scalar_select %p351, %s36, 1
          %s353 = smul.addr %s352, 2
          %s354 = scalar_lea.vmem %s3, %s353
        $region32: #{tpu_custom_call.1} parent=15 // pred_fallthru
          _
        // Predicated region
        $region33: #{tpu_custom_call.1} parent=15 // pred_check
          %p355 = pneg %p165
        $region34: #{tpu_custom_call.1} parent=15 // pred_check_branch
          %357 = sbr.rel (%p355) target = $region36
        $region35: #{tpu_custom_call.1} parent=15 // pred_region
          %s358 = sand.u32 %s29, 1
          %s359 = scalar_lea.sflag [#allocation11], %s358
          %s360 = sand.u32 %s155, 1
          %s361 = smul.addr %s360, 8
          %s362 = scalar_lea.vmem [#allocation10], %s361
          %s364 = ssub.s32 128, 128
          %365 = vsyncadd %s359, %s364
          %s366 = smul.addr %s37, 128
          %s367 = scalar_lea.hbm %s4, %s366
          %s369 = sshll.u32 %s362, 4
          %s370 = int_to_ptr.vmem [resolvable:$true] %s369
          %372 = dma.hbm_to_vmem [thread:$0]  %s367, 128, %s370, %s359
        $region36: #{tpu_custom_call.1} parent=15 // pred_fallthru
          _
        // Predicated region
        $region37: #{tpu_custom_call.1} parent=15 // pred_check
          %p373 = pneg %p191
        $region38: #{tpu_custom_call.1} parent=15 // pred_check_branch
          %375 = sbr.rel (%p373) target = $region40
        $region39: #{tpu_custom_call.1} parent=15 // pred_region
          %s376 = sand.u32 %s29, 1
          %s377 = scalar_lea.sflag [#allocation11], %s376
          %s378 = sand.u32 %s181, 1
          %s379 = smul.addr %s378, 8
          %s380 = scalar_lea.vmem [#allocation12], %s379
          %s382 = ssub.s32 128, 128
          %383 = vsyncadd %s377, %s382
          %s384 = smul.addr %s37, 128
          %s385 = scalar_lea.hbm %s5, %s384
          %s387 = sshll.u32 %s380, 4
          %s388 = int_to_ptr.vmem [resolvable:$true] %s387
          %390 = dma.hbm_to_vmem [thread:$0]  %s385, 128, %s388, %s377
        $region40: #{tpu_custom_call.1} parent=15 // pred_fallthru
          _
        // Predicated region
        $region41: #{tpu_custom_call.1} parent=15 // pred_check
          %p391 = pneg %p217
        $region42: #{tpu_custom_call.1} parent=15 // pred_check_branch
          %393 = sbr.rel (%p391) target = $region44
        $region43: #{tpu_custom_call.1} parent=15 // pred_region
          %s394 = sand.u32 %s29, 1
          %s395 = scalar_lea.sflag [#allocation14], %s394
          %s396 = sand.u32 %s207, 1
          %s397 = smul.addr %s396, 8
          %s398 = scalar_lea.vmem [#allocation13], %s397
          %s400 = ssub.s32 128, 128
          %401 = vsyncadd %s395, %s400
          %s402 = smul.addr %s37, 128
          %s403 = scalar_lea.hbm %s6, %s402
          %s405 = sshll.u32 %s398, 4
          %s406 = int_to_ptr.vmem [resolvable:$true] %s405
          %408 = dma.hbm_to_vmem [thread:$0]  %s403, 128, %s406, %s395
        $region44: #{tpu_custom_call.1} parent=15 // pred_fallthru
          _
        // Predicated region
        $region45: #{tpu_custom_call.1} parent=15 // pred_check
          %p409 = pneg %p243
        $region46: #{tpu_custom_call.1} parent=15 // pred_check_branch
          %411 = sbr.rel (%p409) target = $region48
        $region47: #{tpu_custom_call.1} parent=15 // pred_region
          %s412 = sand.u32 %s29, 1
          %s413 = scalar_lea.sflag [#allocation14], %s412
          %s414 = sand.u32 %s233, 1
          %s415 = smul.addr %s414, 8
          %s416 = scalar_lea.vmem [#allocation15], %s415
          %s418 = ssub.s32 128, 128
          %419 = vsyncadd %s413, %s418
          %s420 = smul.addr %s37, 128
          %s421 = scalar_lea.hbm %s7, %s420
          %s423 = sshll.u32 %s416, 4
          %s424 = int_to_ptr.vmem [resolvable:$true] %s423
          %426 = dma.hbm_to_vmem [thread:$0]  %s421, 128, %s424, %s413
        $region48: #{tpu_custom_call.1} parent=15 // pred_fallthru
          _
      $region16: #{tpu_custom_call.1} parent=5 // pred_fallthru
        _
      %p427 = scmp.le.s32.totalorder 1, %s29
      %p428 = scmp.lt.s32.totalorder %s29, 9
      %p429 = pnand %p427, %p428
      %p430 = pneg %p429
      // Predicated region
      $region49: #{tpu_custom_call.1} parent=5 // pred_check
        _
      $region50: #{tpu_custom_call.1} parent=5 // pred_check_branch
        %432 = sbr.rel (%p429) target = $region52
      $region51: #{tpu_custom_call.1} parent=5 // pred_region
        %s433 = ssub.s32 %s29, 1
        %s434 = sand.u32 %s54, 1
        %s435 = scalar_lea.sflag [#allocation5], %s434
        %s436 = sand.u32 %s54, 1
        %s437 = smul.addr %s436, 8
        %s438 = scalar_lea.vmem [#allocation4], %s437
        // Predicated region
        $region53: #{tpu_custom_call.1} parent=51 // pred_check
          %p439 = pneg %p67
        $region54: #{tpu_custom_call.1} parent=51 // pred_check_branch
          %441 = sbr.rel (%p439) target = $region56
        $region55: #{tpu_custom_call.1} parent=51 // pred_region
          %442 = dma.done %s435, 128
        $region56: #{tpu_custom_call.1} parent=51 // pred_fallthru
          _
        %s443 = sand.u32 %s34, 1
        %s444 = scalar_lea.sflag [#allocation8], %s443
        %s445 = sand.u32 %s80, 1
        %s446 = smul.addr %s445, 8
        %s447 = scalar_lea.vmem [#allocation7], %s446
        // Predicated region
        $region57: #{tpu_custom_call.1} parent=51 // pred_check
          %p448 = pneg %p93
        $region58: #{tpu_custom_call.1} parent=51 // pred_check_branch
          %450 = sbr.rel (%p448) target = $region60
        $region59: #{tpu_custom_call.1} parent=51 // pred_region
          %451 = dma.done %s444, 128
        $region60: #{tpu_custom_call.1} parent=51 // pred_fallthru
          _
        %s452 = sand.u32 %s34, 1
        %s453 = scalar_lea.sflag [#allocation8], %s452
        %s454 = sand.u32 %s106, 1
        %s455 = smul.addr %s454, 8
        %s456 = scalar_lea.vmem [#allocation9], %s455
        // Predicated region
        $region61: #{tpu_custom_call.1} parent=51 // pred_check
          %p457 = pneg %p119
        $region62: #{tpu_custom_call.1} parent=51 // pred_check_branch
          %459 = sbr.rel (%p457) target = $region64
        $region63: #{tpu_custom_call.1} parent=51 // pred_region
          %460 = dma.done %s453, 128
        $region64: #{tpu_custom_call.1} parent=51 // pred_fallthru
          _
        %s461 = sand.u32 %s34, 1
        %s462 = scalar_lea.sflag [#allocation11], %s461
        %s463 = sand.u32 %s158, 1
        %s464 = smul.addr %s463, 8
        %s465 = scalar_lea.vmem [#allocation10], %s464
        // Predicated region
        $region65: #{tpu_custom_call.1} parent=51 // pred_check
          %p466 = pneg %p171
        $region66: #{tpu_custom_call.1} parent=51 // pred_check_branch
          %468 = sbr.rel (%p466) target = $region68
        $region67: #{tpu_custom_call.1} parent=51 // pred_region
          %469 = dma.done %s462, 128
        $region68: #{tpu_custom_call.1} parent=51 // pred_fallthru
          _
        %s470 = sand.u32 %s34, 1
        %s471 = scalar_lea.sflag [#allocation11], %s470
        %s472 = sand.u32 %s184, 1
        %s473 = smul.addr %s472, 8
        %s474 = scalar_lea.vmem [#allocation12], %s473
        // Predicated region
        $region69: #{tpu_custom_call.1} parent=51 // pred_check
          %p475 = pneg %p197
        $region70: #{tpu_custom_call.1} parent=51 // pred_check_branch
          %477 = sbr.rel (%p475) target = $region72
        $region71: #{tpu_custom_call.1} parent=51 // pred_region
          %478 = dma.done %s471, 128
        $region72: #{tpu_custom_call.1} parent=51 // pred_fallthru
          _
        %s479 = sand.u32 %s34, 1
        %s480 = scalar_lea.sflag [#allocation14], %s479
        %s481 = sand.u32 %s210, 1
        %s482 = smul.addr %s481, 8
        %s483 = scalar_lea.vmem [#allocation13], %s482
        // Predicated region
        $region73: #{tpu_custom_call.1} parent=51 // pred_check
          %p484 = pneg %p223
        $region74: #{tpu_custom_call.1} parent=51 // pred_check_branch
          %486 = sbr.rel (%p484) target = $region76
        $region75: #{tpu_custom_call.1} parent=51 // pred_region
          %487 = dma.done %s480, 128
        $region76: #{tpu_custom_call.1} parent=51 // pred_fallthru
          _
        %s488 = sand.u32 %s34, 1
        %s489 = scalar_lea.sflag [#allocation14], %s488
        %s490 = sand.u32 %s236, 1
        %s491 = smul.addr %s490, 8
        %s492 = scalar_lea.vmem [#allocation15], %s491
        // Predicated region
        $region77: #{tpu_custom_call.1} parent=51 // pred_check
          %p493 = pneg %p249
        $region78: #{tpu_custom_call.1} parent=51 // pred_check_branch
          %495 = sbr.rel (%p493) target = $region80
        $region79: #{tpu_custom_call.1} parent=51 // pred_region
          %496 = dma.done %s489, 128
        $region80: #{tpu_custom_call.1} parent=51 // pred_fallthru
          _
        %s497 = sand.u32 %s54, 1
        %s498 = scalar_lea.sflag [#allocation5], %s497
        %s499 = sand.u32 %s54, 1
        %s500 = smul.addr %s499, 8
        %s501 = scalar_lea.vmem [#allocation4], %s500
        %p502 = pneg %p67
        %p503 = pneg %p64
        %s504 = sand.u32 %s34, 1
        %s505 = scalar_lea.sflag [#allocation8], %s504
        %s506 = sand.u32 %s80, 1
        %s507 = smul.addr %s506, 8
        %s508 = scalar_lea.vmem [#allocation7], %s507
        %p509 = pneg %p93
        %p510 = pneg %p90
        %s511 = sand.u32 %s34, 1
        %s512 = scalar_lea.sflag [#allocation8], %s511
        %s513 = sand.u32 %s106, 1
        %s514 = smul.addr %s513, 8
        %s515 = scalar_lea.vmem [#allocation9], %s514
        %p516 = pneg %p119
        %p517 = pneg %p116
        %p518 = scmp.lt.s32.totalorder %s38, 1
        %s519 = scalar_select %p518, %s38, 1
        %s520 = smul.addr %s519, 2
        %s521 = scalar_lea.vmem %s3, %s520
        %p522 = pneg %p145
        %p523 = pneg %p142
        %s524 = sand.u32 %s34, 1
        %s525 = scalar_lea.sflag [#allocation11], %s524
        %s526 = sand.u32 %s158, 1
        %s527 = smul.addr %s526, 8
        %s528 = scalar_lea.vmem [#allocation10], %s527
        %p529 = pneg %p171
        %p530 = pneg %p168
        %s531 = sand.u32 %s34, 1
        %s532 = scalar_lea.sflag [#allocation11], %s531
        %s533 = sand.u32 %s184, 1
        %s534 = smul.addr %s533, 8
        %s535 = scalar_lea.vmem [#allocation12], %s534
        %p536 = pneg %p197
        %p537 = pneg %p194
        %s538 = sand.u32 %s34, 1
        %s539 = scalar_lea.sflag [#allocation14], %s538
        %s540 = sand.u32 %s210, 1
        %s541 = smul.addr %s540, 8
        %s542 = scalar_lea.vmem [#allocation13], %s541
        %p543 = pneg %p223
        %p544 = pneg %p220
        %s545 = sand.u32 %s34, 1
        %s546 = scalar_lea.sflag [#allocation14], %s545
        %s547 = sand.u32 %s236, 1
        %s548 = smul.addr %s547, 8
        %s549 = scalar_lea.vmem [#allocation15], %s548
        %p550 = pneg %p249
        %p551 = pneg %p246
        %p552 = pneg %p275
        %p553 = pneg %p272
        %s554 = sand.u32 %s262, 1
        %s555 = scalar_lea.sflag [#allocation6], %s554
        %s556 = sand.u32 %s262, 1
        %s557 = smul.addr %s556, 8
        %s558 = scalar_lea.vmem [#allocation16], %s557
        %p559 = scmp.lt.s32.totalorder %s38, 1
        %s560 = scalar_select %p559, %s38, 1
        %s561 = smul.addr %s560, 2
        %s562 = scalar_lea.vmem %s3, %s561
        %p563 = scmp.eq.s32.totalorder %s39, 0
        // Predicated region
        $region81: #{tpu_custom_call.1} parent=51 // pred_check
          %p564 = pneg %p563
        $region82: #{tpu_custom_call.1} parent=51 // pred_check_branch
          %566 = sbr.rel (%p564) target = $region84
        $region83: #{tpu_custom_call.1} parent=51 // pred_region
          %vm567 = vcmask 261120
          %568 = vst.msk [vmem:[#allocation2] sm:$0xff] %vm567, 0.0
          %v569 = vld [vmem:[%s562] sm:$0x3]
          %v570 = vunpack.c.0.s8 %v569
          %vm571 = vcmp.eq.s32.totalorder %v570, 0
          %v572 = vsel %vm571, -1e+09, 0.0
          %vm573 = vcmask 64512
          %574 = vst.msk [vmem:[#allocation3] sm:$0xff] %vm573, %v572
        $region84: #{tpu_custom_call.1} parent=51 // pred_fallthru
          _
        %v575 = vld [vmem:[%s438] sm:$0xff]
        %v576 = vld [vmem:[%s447] sm:$0xff]
        %v577 = vld [vmem:[%s456] sm:$0xff]
        %v578 = vld [vmem:[%s465] sm:$0xff]
        %vm579 = vcmask 261120
        %v581 = vsel %vm579, %v575, 0
        %v584 = vsel %vm579, %v578, 0
        %586 = vmatprep.subr.mxu0 0.0
        %587 = vmatpush1.xpose.msra.mxu0 %v584
        %588 = vmatprep.subr.mxu0 0.0
        %589 = vmatpush1.xpose.msra.mxu0 0.0
        %590 = vmatprep.subr.mxu0 0.0
        %591 = vmatpush1.xpose.msra.mxu0 0.0
        %592 = vmatprep.subr.mxu0 0.0
        %593 = vmatpush1.xpose.msra.mxu0 0.0
        %594 = vmatprep.subr.mxu0 0.0
        %595 = vmatpush1.xpose.msra.mxu0 0.0
        %596 = vmatprep.subr.mxu0 0.0
        %597 = vmatpush1.xpose.msra.mxu0 0.0
        %598 = vmatprep.subr.mxu0 0.0
        %599 = vmatpush1.xpose.msra.mxu0 0.0
        %600 = vmatprep.subr.mxu0 0.0
        %601 = vmatpush1.xpose.msra.mxu0 0.0
        %602 = vmatprep.subr.mxu0 0.0
        %603 = vmatpush1.xpose.msra.mxu0 0.0
        %604 = vmatprep.subr.mxu0 0.0
        %605 = vmatpush1.xpose.msra.mxu0 0.0
        %606 = vmatprep.subr.mxu0 0.0
        %607 = vmatpush1.xpose.msra.mxu0 0.0
        %608 = vmatprep.subr.mxu0 0.0
        %609 = vmatpush1.xpose.msra.mxu0 0.0
        %610 = vmatprep.subr.mxu0 0.0
        %611 = vmatpush1.xpose.msra.mxu0 0.0
        %612 = vmatprep.subr.mxu0 0.0
        %613 = vmatpush1.xpose.msra.mxu0 0.0
        %614 = vmatprep.subr.mxu0 0.0
        %615 = vmatpush1.xpose.msra.mxu0 0.0
        %616 = vmatprep.subr.mxu0 0.0
        %617 = vmatpush1.xpose.msra.mxu0 0.0
        %618 = vmatprep.subr.mxu0 0.0
        %619 = vmatpush1.xpose.msra.mxu0 0.0
        %620 = vmatprep.subr.mxu0 0.0
        %621 = vmatpush1.xpose.msra.mxu0 0.0
        %622 = vmatprep.subr.mxu0 0.0
        %623 = vmatpush1.xpose.msra.mxu0 0.0
        %624 = vmatprep.subr.mxu0 0.0
        %625 = vmatpush1.xpose.msra.mxu0 0.0
        %626 = vmatprep.subr.mxu0 0.0
        %627 = vmatpush1.xpose.msra.mxu0 0.0
        %628 = vmatprep.subr.mxu0 0.0
        %629 = vmatpush1.xpose.msra.mxu0 0.0
        %630 = vmatprep.subr.mxu0 0.0
        %631 = vmatpush1.xpose.msra.mxu0 0.0
        %632 = vmatprep.subr.mxu0 0.0
        %633 = vmatpush1.xpose.msra.mxu0 0.0
        %634 = vmatprep.subr.mxu0 0.0
        %635 = vmatpush1.xpose.msra.mxu0 0.0
        %636 = vmatprep.subr.mxu0 0.0
        %637 = vmatpush1.xpose.msra.mxu0 0.0
        %638 = vmatprep.subr.mxu0 0.0
        %639 = vmatpush1.xpose.msra.mxu0 0.0
        %640 = vmatprep.subr.mxu0 0.0
        %641 = vmatpush1.xpose.msra.mxu0 0.0
        %642 = vmatprep.subr.mxu0 0.0
        %643 = vmatpush1.xpose.msra.mxu0 0.0
        %644 = vmatprep.subr.mxu0 0.0
        %645 = vmatpush1.xpose.msra.mxu0 0.0
        %646 = vmatprep.subr.mxu0 0.0
        %647 = vmatpush1.xpose.msra.mxu0 0.0
        %648 = vmatprep.subr.mxu0 0.0
        %649 = vmatpush1.xpose.msra.mxu0 0.0
        %650 = vmatprep.mubr.f32.mxu0 0.0
        %651 = vmatmul.mubr.f32.gmra.mrb[0].mxu0 %v581
        %v652 = vpop.f32.mrb[0].mxu0
        %v653 = vadd.f32 0.0, %v652
        %v654 = vpop.f32.mrb[0].mxu0
        %655 = vdwg.mxu0
        %v656 = vld [vmem:[%s474] sm:$0xff]
        %v658 = vsel %vm579, %v576, 0
        %v661 = vsel %vm579, %v656, 0
        %663 = vmatprep.subr.mxu0 0.0
        %664 = vmatpush1.xpose.msra.mxu0 %v661
        %665 = vmatprep.subr.mxu0 0.0
        %666 = vmatpush1.xpose.msra.mxu0 0.0
        %667 = vmatprep.subr.mxu0 0.0
        %668 = vmatpush1.xpose.msra.mxu0 0.0
        %669 = vmatprep.subr.mxu0 0.0
        %670 = vmatpush1.xpose.msra.mxu0 0.0
        %671 = vmatprep.subr.mxu0 0.0
        %672 = vmatpush1.xpose.msra.mxu0 0.0
        %673 = vmatprep.subr.mxu0 0.0
        %674 = vmatpush1.xpose.msra.mxu0 0.0
        %675 = vmatprep.subr.mxu0 0.0
        %676 = vmatpush1.xpose.msra.mxu0 0.0
        %677 = vmatprep.subr.mxu0 0.0
        %678 = vmatpush1.xpose.msra.mxu0 0.0
        %679 = vmatprep.subr.mxu0 0.0
        %680 = vmatpush1.xpose.msra.mxu0 0.0
        %681 = vmatprep.subr.mxu0 0.0
        %682 = vmatpush1.xpose.msra.mxu0 0.0
        %683 = vmatprep.subr.mxu0 0.0
        %684 = vmatpush1.xpose.msra.mxu0 0.0
        %685 = vmatprep.subr.mxu0 0.0
        %686 = vmatpush1.xpose.msra.mxu0 0.0
        %687 = vmatprep.subr.mxu0 0.0
        %688 = vmatpush1.xpose.msra.mxu0 0.0
        %689 = vmatprep.subr.mxu0 0.0
        %690 = vmatpush1.xpose.msra.mxu0 0.0
        %691 = vmatprep.subr.mxu0 0.0
        %692 = vmatpush1.xpose.msra.mxu0 0.0
        %693 = vmatprep.subr.mxu0 0.0
        %694 = vmatpush1.xpose.msra.mxu0 0.0
        %695 = vmatprep.subr.mxu0 0.0
        %696 = vmatpush1.xpose.msra.mxu0 0.0
        %697 = vmatprep.subr.mxu0 0.0
        %698 = vmatpush1.xpose.msra.mxu0 0.0
        %699 = vmatprep.subr.mxu0 0.0
        %700 = vmatpush1.xpose.msra.mxu0 0.0
        %701 = vmatprep.subr.mxu0 0.0
        %702 = vmatpush1.xpose.msra.mxu0 0.0
        %703 = vmatprep.subr.mxu0 0.0
        %704 = vmatpush1.xpose.msra.mxu0 0.0
        %705 = vmatprep.subr.mxu0 0.0
        %706 = vmatpush1.xpose.msra.mxu0 0.0
        %707 = vmatprep.subr.mxu0 0.0
        %708 = vmatpush1.xpose.msra.mxu0 0.0
        %709 = vmatprep.subr.mxu0 0.0
        %710 = vmatpush1.xpose.msra.mxu0 0.0
        %711 = vmatprep.subr.mxu0 0.0
        %712 = vmatpush1.xpose.msra.mxu0 0.0
        %713 = vmatprep.subr.mxu0 0.0
        %714 = vmatpush1.xpose.msra.mxu0 0.0
        %715 = vmatprep.subr.mxu0 0.0
        %716 = vmatpush1.xpose.msra.mxu0 0.0
        %717 = vmatprep.subr.mxu0 0.0
        %718 = vmatpush1.xpose.msra.mxu0 0.0
        %719 = vmatprep.subr.mxu0 0.0
        %720 = vmatpush1.xpose.msra.mxu0 0.0
        %721 = vmatprep.subr.mxu0 0.0
        %722 = vmatpush1.xpose.msra.mxu0 0.0
        %723 = vmatprep.subr.mxu0 0.0
        %724 = vmatpush1.xpose.msra.mxu0 0.0
        %725 = vmatprep.subr.mxu0 0.0
        %726 = vmatpush1.xpose.msra.mxu0 0.0
        %727 = vmatprep.mubr.f32.mxu0 0.0
        %728 = vmatmul.mubr.f32.gmra.mrb[0].mxu0 %v658
        %v729 = vpop.f32.mrb[0].mxu0
        %v730 = vadd.f32 0.0, %v729
        %v731 = vpop.f32.mrb[0].mxu0
        %732 = vdwg.mxu0
        %v733 = vld [vmem:[%s483] sm:$0xff]
        %v735 = vsel %vm579, %v577, 0
        %v738 = vsel %vm579, %v733, 0
        %740 = vmatprep.subr.mxu0 0.0
        %741 = vmatpush1.xpose.msra.mxu0 %v738
        %742 = vmatprep.subr.mxu0 0.0
        %743 = vmatpush1.xpose.msra.mxu0 0.0
        %744 = vmatprep.subr.mxu0 0.0
        %745 = vmatpush1.xpose.msra.mxu0 0.0
        %746 = vmatprep.subr.mxu0 0.0
        %747 = vmatpush1.xpose.msra.mxu0 0.0
        %748 = vmatprep.subr.mxu0 0.0
        %749 = vmatpush1.xpose.msra.mxu0 0.0
        %750 = vmatprep.subr.mxu0 0.0
        %751 = vmatpush1.xpose.msra.mxu0 0.0
        %752 = vmatprep.subr.mxu0 0.0
        %753 = vmatpush1.xpose.msra.mxu0 0.0
        %754 = vmatprep.subr.mxu0 0.0
        %755 = vmatpush1.xpose.msra.mxu0 0.0
        %756 = vmatprep.subr.mxu0 0.0
        %757 = vmatpush1.xpose.msra.mxu0 0.0
        %758 = vmatprep.subr.mxu0 0.0
        %759 = vmatpush1.xpose.msra.mxu0 0.0
        %760 = vmatprep.subr.mxu0 0.0
        %761 = vmatpush1.xpose.msra.mxu0 0.0
        %762 = vmatprep.subr.mxu0 0.0
        %763 = vmatpush1.xpose.msra.mxu0 0.0
        %764 = vmatprep.subr.mxu0 0.0
        %765 = vmatpush1.xpose.msra.mxu0 0.0
        %766 = vmatprep.subr.mxu0 0.0
        %767 = vmatpush1.xpose.msra.mxu0 0.0
        %768 = vmatprep.subr.mxu0 0.0
        %769 = vmatpush1.xpose.msra.mxu0 0.0
        %770 = vmatprep.subr.mxu0 0.0
        %771 = vmatpush1.xpose.msra.mxu0 0.0
        %772 = vmatprep.subr.mxu0 0.0
        %773 = vmatpush1.xpose.msra.mxu0 0.0
        %774 = vmatprep.subr.mxu0 0.0
        %775 = vmatpush1.xpose.msra.mxu0 0.0
        %776 = vmatprep.subr.mxu0 0.0
        %777 = vmatpush1.xpose.msra.mxu0 0.0
        %778 = vmatprep.subr.mxu0 0.0
        %779 = vmatpush1.xpose.msra.mxu0 0.0
        %780 = vmatprep.subr.mxu0 0.0
        %781 = vmatpush1.xpose.msra.mxu0 0.0
        %782 = vmatprep.subr.mxu0 0.0
        %783 = vmatpush1.xpose.msra.mxu0 0.0
        %784 = vmatprep.subr.mxu0 0.0
        %785 = vmatpush1.xpose.msra.mxu0 0.0
        %786 = vmatprep.subr.mxu0 0.0
        %787 = vmatpush1.xpose.msra.mxu0 0.0
        %788 = vmatprep.subr.mxu0 0.0
        %789 = vmatpush1.xpose.msra.mxu0 0.0
        %790 = vmatprep.subr.mxu0 0.0
        %791 = vmatpush1.xpose.msra.mxu0 0.0
        %792 = vmatprep.subr.mxu0 0.0
        %793 = vmatpush1.xpose.msra.mxu0 0.0
        %794 = vmatprep.subr.mxu0 0.0
        %795 = vmatpush1.xpose.msra.mxu0 0.0
        %796 = vmatprep.subr.mxu0 0.0
        %797 = vmatpush1.xpose.msra.mxu0 0.0
        %798 = vmatprep.subr.mxu0 0.0
        %799 = vmatpush1.xpose.msra.mxu0 0.0
        %800 = vmatprep.subr.mxu0 0.0
        %801 = vmatpush1.xpose.msra.mxu0 0.0
        %802 = vmatprep.subr.mxu0 0.0
        %803 = vmatpush1.xpose.msra.mxu0 0.0
        %804 = vmatprep.mubr.f32.mxu0 0.0
        %805 = vmatmul.mubr.f32.gmra.mrb[0].mxu0 %v735
        %v806 = vpop.f32.mrb[0].mxu0
        %v807 = vadd.f32 0.0, %v806
        %v808 = vpop.f32.mrb[0].mxu0
        %809 = vdwg.mxu0
        %v810 = vmul.f32 %v653, 0.35355338
        %v811 = vld [vmem:[#allocation3] sm:$0xff]
        %vm812 = vcmask 64512
        %v814 = vsel %vm812, %v810, 0
        %v817 = vsel %vm812, %v730, 0
        %819 = vmatprep.subr.mxu0 0.0
        %820 = vmatpush1.xpose.msra.mxu0 %v817
        %821 = vmatprep.subr.mxu0 0.0
        %822 = vmatpush1.xpose.msra.mxu0 0.0
        %823 = vmatprep.subr.mxu0 0.0
        %824 = vmatpush1.xpose.msra.mxu0 0.0
        %825 = vmatprep.subr.mxu0 0.0
        %826 = vmatpush1.xpose.msra.mxu0 0.0
        %827 = vmatprep.subr.mxu0 0.0
        %828 = vmatpush1.xpose.msra.mxu0 0.0
        %829 = vmatprep.subr.mxu0 0.0
        %830 = vmatpush1.xpose.msra.mxu0 0.0
        %831 = vmatprep.subr.mxu0 0.0
        %832 = vmatpush1.xpose.msra.mxu0 0.0
        %833 = vmatprep.subr.mxu0 0.0
        %834 = vmatpush1.xpose.msra.mxu0 0.0
        %835 = vmatprep.subr.mxu0 0.0
        %836 = vmatpush1.xpose.msra.mxu0 0.0
        %837 = vmatprep.subr.mxu0 0.0
        %838 = vmatpush1.xpose.msra.mxu0 0.0
        %839 = vmatprep.subr.mxu0 0.0
        %840 = vmatpush1.xpose.msra.mxu0 0.0
        %841 = vmatprep.subr.mxu0 0.0
        %842 = vmatpush1.xpose.msra.mxu0 0.0
        %843 = vmatprep.subr.mxu0 0.0
        %844 = vmatpush1.xpose.msra.mxu0 0.0
        %845 = vmatprep.subr.mxu0 0.0
        %846 = vmatpush1.xpose.msra.mxu0 0.0
        %847 = vmatprep.subr.mxu0 0.0
        %848 = vmatpush1.xpose.msra.mxu0 0.0
        %849 = vmatprep.subr.mxu0 0.0
        %850 = vmatpush1.xpose.msra.mxu0 0.0
        %851 = vmatprep.subr.mxu0 0.0
        %852 = vmatpush1.xpose.msra.mxu0 0.0
        %853 = vmatprep.subr.mxu0 0.0
        %854 = vmatpush1.xpose.msra.mxu0 0.0
        %855 = vmatprep.subr.mxu0 0.0
        %856 = vmatpush1.xpose.msra.mxu0 0.0
        %857 = vmatprep.subr.mxu0 0.0
        %858 = vmatpush1.xpose.msra.mxu0 0.0
        %859 = vmatprep.subr.mxu0 0.0
        %860 = vmatpush1.xpose.msra.mxu0 0.0
        %861 = vmatprep.subr.mxu0 0.0
        %862 = vmatpush1.xpose.msra.mxu0 0.0
        %863 = vmatprep.subr.mxu0 0.0
        %864 = vmatpush1.xpose.msra.mxu0 0.0
        %865 = vmatprep.subr.mxu0 0.0
        %866 = vmatpush1.xpose.msra.mxu0 0.0
        %867 = vmatprep.subr.mxu0 0.0
        %868 = vmatpush1.xpose.msra.mxu0 0.0
        %869 = vmatprep.subr.mxu0 0.0
        %870 = vmatpush1.xpose.msra.mxu0 0.0
        %871 = vmatprep.subr.mxu0 0.0
        %872 = vmatpush1.xpose.msra.mxu0 0.0
        %873 = vmatprep.subr.mxu0 0.0
        %874 = vmatpush1.xpose.msra.mxu0 0.0
        %875 = vmatprep.subr.mxu0 0.0
        %876 = vmatpush1.xpose.msra.mxu0 0.0
        %877 = vmatprep.subr.mxu0 0.0
        %878 = vmatpush1.xpose.msra.mxu0 0.0
        %879 = vmatprep.subr.mxu0 0.0
        %880 = vmatpush1.xpose.msra.mxu0 0.0
        %881 = vmatprep.subr.mxu0 0.0
        %882 = vmatpush1.xpose.msra.mxu0 0.0
        %883 = vmatprep.mubr.f32.mxu0 0.0
        %884 = vmatmul.mubr.f32.gmra.mrb[0].mxu0 %v814
        %v885 = vpop.f32.mrb[0].mxu0
        %v886 = vadd.f32 %v811, %v885
        %v887 = vpop.f32.mrb[0].mxu0
        %888 = vdwg.mxu0
        %v889 = vsel %vm812, %v886, -inf
        %890 = vmax.xlane.f32.xlu0 %v889
        %v891 = vpop.xlane.xlu0 %890
        %v892 = vsub.f32 %v886, %v891
        %v893 = vmul.f32 %v892, 1.442695
        %v894 = vpow.pop %v893
        %v895 = vsel %vm812, %v894, 0.0
        %896 = vadd.xlane.f32.xlu0 %v895
        %v897 = vpop.xlane.xlu0 %896
        %v898 = vrcp.pop %v897
        %v899 = vmul.f32 %v894, %v898
        %v901 = vsel %vm812, %v899, 0
        %903 = vmatprep.subr.mxu0 0.0
        %904 = vmatpush1.msra.mxu0 %v807
        %905 = vmatprep.subr.mxu0 0.0
        %906 = vmatpush1.msra.mxu0 0.0
        %907 = vmatprep.subr.mxu0 0.0
        %908 = vmatpush1.msra.mxu0 0.0
        %909 = vmatprep.subr.mxu0 0.0
        %910 = vmatpush1.msra.mxu0 0.0
        %911 = vmatprep.subr.mxu0 0.0
        %912 = vmatpush1.msra.mxu0 0.0
        %913 = vmatprep.subr.mxu0 0.0
        %914 = vmatpush1.msra.mxu0 0.0
        %915 = vmatprep.subr.mxu0 0.0
        %916 = vmatpush1.msra.mxu0 0.0
        %917 = vmatprep.subr.mxu0 0.0
        %918 = vmatpush1.msra.mxu0 0.0
        %919 = vmatprep.subr.mxu0 0.0
        %920 = vmatpush1.msra.mxu0 0.0
        %921 = vmatprep.subr.mxu0 0.0
        %922 = vmatpush1.msra.mxu0 0.0
        %923 = vmatprep.subr.mxu0 0.0
        %924 = vmatpush1.msra.mxu0 0.0
        %925 = vmatprep.subr.mxu0 0.0
        %926 = vmatpush1.msra.mxu0 0.0
        %927 = vmatprep.subr.mxu0 0.0
        %928 = vmatpush1.msra.mxu0 0.0
        %929 = vmatprep.subr.mxu0 0.0
        %930 = vmatpush1.msra.mxu0 0.0
        %931 = vmatprep.subr.mxu0 0.0
        %932 = vmatpush1.msra.mxu0 0.0
        %933 = vmatprep.subr.mxu0 0.0
        %934 = vmatpush1.msra.mxu0 0.0
        %935 = vmatprep.subr.mxu0 0.0
        %936 = vmatpush1.msra.mxu0 0.0
        %937 = vmatprep.subr.mxu0 0.0
        %938 = vmatpush1.msra.mxu0 0.0
        %939 = vmatprep.subr.mxu0 0.0
        %940 = vmatpush1.msra.mxu0 0.0
        %941 = vmatprep.subr.mxu0 0.0
        %942 = vmatpush1.msra.mxu0 0.0
        %943 = vmatprep.subr.mxu0 0.0
        %944 = vmatpush1.msra.mxu0 0.0
        %945 = vmatprep.subr.mxu0 0.0
        %946 = vmatpush1.msra.mxu0 0.0
        %947 = vmatprep.subr.mxu0 0.0
        %948 = vmatpush1.msra.mxu0 0.0
        %949 = vmatprep.subr.mxu0 0.0
        %950 = vmatpush1.msra.mxu0 0.0
        %951 = vmatprep.subr.mxu0 0.0
        %952 = vmatpush1.msra.mxu0 0.0
        %953 = vmatprep.subr.mxu0 0.0
        %954 = vmatpush1.msra.mxu0 0.0
        %955 = vmatprep.subr.mxu0 0.0
        %956 = vmatpush1.msra.mxu0 0.0
        %957 = vmatprep.subr.mxu0 0.0
        %958 = vmatpush1.msra.mxu0 0.0
        %959 = vmatprep.subr.mxu0 0.0
        %960 = vmatpush1.msra.mxu0 0.0
        %961 = vmatprep.subr.mxu0 0.0
        %962 = vmatpush1.msra.mxu0 0.0
        %963 = vmatprep.subr.mxu0 0.0
        %964 = vmatpush1.msra.mxu0 0.0
        %965 = vmatprep.subr.mxu0 0.0
        %966 = vmatpush1.msra.mxu0 0.0
        %967 = vmatprep.mubr.f32.mxu0 0.0
        %968 = vmatmul.mubr.f32.gmra.mrb[0].mxu0 %v901
        %v969 = vpop.f32.mrb[0].mxu0
        %v970 = vadd.f32 0.0, %v969
        %v971 = vpop.f32.mrb[0].mxu0
        %972 = vdwg.mxu0
        %v973 = vld [vmem:[#allocation2] sm:$0xff]
        %v974 = vld [vmem:[%s492] sm:$0xff]
        %v976 = vsel %vm812, %v970, 0
        %978 = vmatprep.subr.mxu0 0.0
        %979 = vmatpush1.msra.mxu0 %v974
        %980 = vmatprep.subr.mxu0 0.0
        %981 = vmatpush1.msra.mxu0 0.0
        %982 = vmatprep.subr.mxu0 0.0
        %983 = vmatpush1.msra.mxu0 0.0
        %984 = vmatprep.subr.mxu0 0.0
        %985 = vmatpush1.msra.mxu0 0.0
        %986 = vmatprep.subr.mxu0 0.0
        %987 = vmatpush1.msra.mxu0 0.0
        %988 = vmatprep.subr.mxu0 0.0
        %989 = vmatpush1.msra.mxu0 0.0
        %990 = vmatprep.subr.mxu0 0.0
        %991 = vmatpush1.msra.mxu0 0.0
        %992 = vmatprep.subr.mxu0 0.0
        %993 = vmatpush1.msra.mxu0 0.0
        %994 = vmatprep.subr.mxu0 0.0
        %995 = vmatpush1.msra.mxu0 0.0
        %996 = vmatprep.subr.mxu0 0.0
        %997 = vmatpush1.msra.mxu0 0.0
        %998 = vmatprep.subr.mxu0 0.0
        %999 = vmatpush1.msra.mxu0 0.0
        %1000 = vmatprep.subr.mxu0 0.0
        %1001 = vmatpush1.msra.mxu0 0.0
        %1002 = vmatprep.subr.mxu0 0.0
        %1003 = vmatpush1.msra.mxu0 0.0
        %1004 = vmatprep.subr.mxu0 0.0
        %1005 = vmatpush1.msra.mxu0 0.0
        %1006 = vmatprep.subr.mxu0 0.0
        %1007 = vmatpush1.msra.mxu0 0.0
        %1008 = vmatprep.subr.mxu0 0.0
        %1009 = vmatpush1.msra.mxu0 0.0
        %1010 = vmatprep.subr.mxu0 0.0
        %1011 = vmatpush1.msra.mxu0 0.0
        %1012 = vmatprep.subr.mxu0 0.0
        %1013 = vmatpush1.msra.mxu0 0.0
        %1014 = vmatprep.subr.mxu0 0.0
        %1015 = vmatpush1.msra.mxu0 0.0
        %1016 = vmatprep.subr.mxu0 0.0
        %1017 = vmatpush1.msra.mxu0 0.0
        %1018 = vmatprep.subr.mxu0 0.0
        %1019 = vmatpush1.msra.mxu0 0.0
        %1020 = vmatprep.subr.mxu0 0.0
        %1021 = vmatpush1.msra.mxu0 0.0
        %1022 = vmatprep.subr.mxu0 0.0
        %1023 = vmatpush1.msra.mxu0 0.0
        %1024 = vmatprep.subr.mxu0 0.0
        %1025 = vmatpush1.msra.mxu0 0.0
        %1026 = vmatprep.subr.mxu0 0.0
        %1027 = vmatpush1.msra.mxu0 0.0
        %1028 = vmatprep.subr.mxu0 0.0
        %1029 = vmatpush1.msra.mxu0 0.0
        %1030 = vmatprep.subr.mxu0 0.0
        %1031 = vmatpush1.msra.mxu0 0.0
        %1032 = vmatprep.subr.mxu0 0.0
        %1033 = vmatpush1.msra.mxu0 0.0
        %1034 = vmatprep.subr.mxu0 0.0
        %1035 = vmatpush1.msra.mxu0 0.0
        %1036 = vmatprep.subr.mxu0 0.0
        %1037 = vmatpush1.msra.mxu0 0.0
        %1038 = vmatprep.subr.mxu0 0.0
        %1039 = vmatpush1.msra.mxu0 0.0
        %1040 = vmatprep.subr.mxu0 0.0
        %1041 = vmatpush1.msra.mxu0 0.0
        %1042 = vmatprep.mubr.f32.mxu0 0.0
        %1043 = vmatmul.mubr.f32.gmra.mrb[0].mxu0 %v976
        %v1044 = vpop.f32.mrb[0].mxu0
        %v1045 = vadd.f32 0.0, %v1044
        %v1046 = vpop.f32.mrb[0].mxu0
        %1047 = vdwg.mxu0
        %v1048 = vadd.f32 %v973, %v1045
        %1049 = vst.msk [vmem:[#allocation2] sm:$0xff] %vm579, %v1048
        %p1050 = scmp.eq.s32.totalorder %s39, 3
        // Predicated region
        $region85: #{tpu_custom_call.1} parent=51 // pred_check
          %p1051 = pneg %p1050
        $region86: #{tpu_custom_call.1} parent=51 // pred_check_branch
          %1053 = sbr.rel (%p1051) target = $region88
        $region87: #{tpu_custom_call.1} parent=51 // pred_region
          %v1054 = vld [vmem:[#allocation2] sm:$0xff]
          %1055 = vst.msk [vmem:[%s558] sm:$0xff] %vm579, %v1054
        $region88: #{tpu_custom_call.1} parent=51 // pred_fallthru
          _
        %s1056 = sand.u32 %s262, 1
        %s1057 = scalar_lea.sflag [#allocation6], %s1056
        %s1058 = sand.u32 %s262, 1
        %s1059 = smul.addr %s1058, 8
        %s1060 = scalar_lea.vmem [#allocation16], %s1059
        // Predicated region
        $region89: #{tpu_custom_call.1} parent=51 // pred_check
          %p1061 = pneg %p272
        $region90: #{tpu_custom_call.1} parent=51 // pred_check_branch
          %1063 = sbr.rel (%p1061) target = $region92
        $region91: #{tpu_custom_call.1} parent=51 // pred_region
          %s1065 = ssub.s32 128, 128
          %1066 = vsyncadd %s1057, %s1065
          %s1067 = smul.addr %s38, 128
          %s1068 = scalar_lea.hbm %s8, %s1067
          %s1070 = sshll.u32 %s1060, 4
          %s1071 = int_to_ptr.vmem [resolvable:$true] %s1070
          %1073 = dma.vmem_to_hbm [thread:$0]  %s1071, 128, %s1068, %s1057
        $region92: #{tpu_custom_call.1} parent=51 // pred_fallthru
          _
      $region52: #{tpu_custom_call.1} parent=5 // pred_fallthru
        _
      %p1074 = scmp.le.s32.totalorder 2, %s29
      // Predicated region
      $region93: #{tpu_custom_call.1} parent=5 // pred_check
        %p1075 = pneg %p1074
      $region94: #{tpu_custom_call.1} parent=5 // pred_check_branch
        %1077 = sbr.rel (%p1075) target = $region96
      $region95: #{tpu_custom_call.1} parent=5 // pred_region
        %s1078 = ssub.s32 %s29, 2
        // Predicated region
        $region97: #{tpu_custom_call.1} parent=95 // pred_check
          %p1079 = pneg %p278
        $region98: #{tpu_custom_call.1} parent=95 // pred_check_branch
          %1081 = sbr.rel (%p1079) target = $region100
        $region99: #{tpu_custom_call.1} parent=95 // pred_region
          %s1082 = sand.u32 %s263, 1
          %s1083 = scalar_lea.sflag [#allocation6], %s1082
          %s1084 = sand.u32 %s263, 1
          %s1085 = smul.addr %s1084, 8
          %s1086 = scalar_lea.vmem [#allocation16], %s1085
          %1087 = dma.done %s1083, 128
        $region100: #{tpu_custom_call.1} parent=95 // pred_fallthru
          _
      $region96: #{tpu_custom_call.1} parent=5 // pred_fallthru
        _
    $region6: #{tpu_custom_call.1} parent=1 // loop_footer
      %s33 = sadd.s32 1, %s29
    $region7: #{tpu_custom_call.1} parent=1 // loop_footer_branch
      %28 = sbr.rel target = $region3
    $region8: #{tpu_custom_call.1} parent=1 // loop_exit
      _
    %1088 = vsyncpa [#allocation5], 1
    %s1089 = scalar_lea.sflag [#allocation5], 1
    %1090 = vsyncpa %s1089, 1
    %1091 = vsyncpa [#allocation8], 1
    %s1092 = scalar_lea.sflag [#allocation8], 1
    %1093 = vsyncpa %s1092, 1
    %1094 = vsyncpa [#allocation11], 1
    %s1095 = scalar_lea.sflag [#allocation11], 1
    %1096 = vsyncpa %s1095, 1
    %1097 = vsyncpa [#allocation14], 1
    %s1098 = scalar_lea.sflag [#allocation14], 1
    %1099 = vsyncpa %s1098, 1
    %1100 = vsyncpa [#allocation6], 1
    %s1101 = scalar_lea.sflag [#allocation6], 1
    %1102 = vsyncpa %s1101, 1

</llo_original>
